<compile_context>
chip_gen: v5e
topology: v5e:2x2
jax: 0.10.0
libtpu: 0.0.40
codegen_flags: <defaults>
</compile_context>

<pallas_src>
import functools

import jax
import jax.numpy as jnp
from jax import lax
from jax.experimental import pallas as pl
from jax.experimental.pallas import tpu as pltpu

LANES = 128
TARGET_BLOCK_BYTES = 1 << 20   # ~1 MiB per input block
MAX_TILE_ROWS_CAP = 4096       # bound accumulator scratch for narrow dtypes
N_CORES = 2                    # v7x has 2 TCs; harmless serial loop of 2 on v5e/v6e


def _heatmap_sl1_kernel(pred_ref, gt_ref, out_ref, acc_ref, *,
                        ratio, total_rows, tile_rows, blocks_per_core, need_mask):
    c = pl.program_id(0)          # "parallel" core axis
    i = pl.program_id(1)          # reduction axis (sequential per core)

    @pl.when(i == 0)
    def _():
        acc_ref[...] = jnp.zeros_like(acc_ref)

    p = pred_ref[...].astype(jnp.float32)
    g = gt_ref[...].astype(jnp.float32)

    d = p - g
    ad = jnp.abs(d)
    sl1 = jnp.where(ad < 1.0, 0.5 * d * d, ad - 0.5)
    w = jnp.where(g != 0.0, jnp.float32(1.0), jnp.float32(ratio))
    contrib = w * sl1

    def accumulate(vals):
        acc_ref[...] += vals      # pure VPU adds; no per-step cross-lane reduce

    if need_mask:
        # Blocks whose DMA index was clamped (assigned past the end of the
        # data) and the ragged tail of the last real block must be zeroed.
        # Interior blocks skip the iota/compare/select work entirely.
        row_start = (c * blocks_per_core + i) * tile_rows
        is_interior = row_start + tile_rows <= total_rows

        @pl.when(is_interior)
        def _():
            accumulate(contrib)

        @pl.when(jnp.logical_not(is_interior))
        def _():
            row_ids = row_start + lax.broadcasted_iota(jnp.int32, contrib.shape, 0)
            accumulate(jnp.where(row_ids < total_rows, contrib, jnp.float32(0.0)))
    else:
        accumulate(contrib)

    @pl.when(i == pl.num_programs(1) - 1)
    def _():
        s = jnp.sum(acc_ref[...])                            # one XLU reduce per core
        r = lax.broadcasted_iota(jnp.int32, (8, LANES), 0)
        cc = lax.broadcasted_iota(jnp.int32, (8, LANES), 1)
        # Lane-dense full-tile store; only [0, 0] of this core's tile is nonzero.
        out_ref[...] = jnp.where((r == 0) & (cc == 0), s, jnp.float32(0.0))


def heatmap_loss_sl1(pred, gt, ratio=0.01, mean=True):
    assert pred.shape == gt.shape, "pred and gt must have the same shape"
    assert ratio <= 1, "HeatmapLossSL1 ratio should be smaller than 1"

    n_elem = pred.size

    # Flatten NCHW row-major in the NATIVE dtype (no full-array cast or pad).
    pred_f = pred.reshape(-1)
    gt_f = gt.reshape(-1)

    # Only if n_elem is not a multiple of 128 do we pad the lane sliver.
    # Zero padding contributes exactly 0 (pred == gt == 0 -> sl1 == 0).
    rem = n_elem % LANES
    if rem:
        # TODO(synk): for non-128-multiple sizes this still copies the arrays;
        # the <128-element sliver could be handled separately to avoid it.
        pred_f = jnp.pad(pred_f, (0, LANES - rem))
        gt_f = jnp.pad(gt_f, (0, LANES - rem))

    rows = pred_f.shape[0] // LANES
    pred_2d = pred_f.reshape(rows, LANES)
    gt_2d = gt_f.reshape(rows, LANES)

    # Sublane granularity for the input dtype (8 for f32, 16 for bf16, ...).
    itemsize = jnp.dtype(pred.dtype).itemsize
    sub = 8 * max(1, 4 // itemsize)
    # Dtype-aware block rows targeting ~1 MiB per input block.
    max_tile_rows = (TARGET_BLOCK_BYTES // (LANES * itemsize)) // sub * sub
    max_tile_rows = min(MAX_TILE_ROWS_CAP, max(sub, max_tile_rows))

    if rows >= max_tile_rows:
        tile_rows = max_tile_rows
    elif rows >= sub:
        tile_rows = (rows // sub) * sub
    else:
        tile_rows = rows            # block equals full array dim: allowed

    num_blocks = pl.cdiv(rows, tile_rows)
    blocks_per_core = pl.cdiv(num_blocks, N_CORES)
    last_block = num_blocks - 1
    need_mask = (N_CORES * blocks_per_core * tile_rows) != rows

    def in_map(c, i):
        # Clamp so DMAs never start past the end of the array; logically
        # out-of-range blocks are fully zeroed by the in-kernel row mask.
        return (jnp.minimum(c * blocks_per_core + i, last_block), 0)

    kernel = functools.partial(
        _heatmap_sl1_kernel,
        ratio=float(ratio),
        total_rows=rows,
        tile_rows=tile_rows,
        blocks_per_core=blocks_per_core,
        need_mask=need_mask,
    )

    partials = pl.pallas_call(
        kernel,
        out_shape=jax.ShapeDtypeStruct((N_CORES * 8, LANES), jnp.float32),
        grid_spec=pltpu.PrefetchScalarGridSpec(
            num_scalar_prefetch=0,
            grid=(N_CORES, blocks_per_core),
            in_specs=[
                pl.BlockSpec((tile_rows, LANES), in_map),
                pl.BlockSpec((tile_rows, LANES), in_map),
            ],
            out_specs=pl.BlockSpec((8, LANES), lambda c, i: (c, 0)),
            scratch_shapes=[pltpu.VMEM((tile_rows, LANES), jnp.float32)],
        ),
        compiler_params=pltpu.CompilerParams(
            dimension_semantics=("parallel", "arbitrary"),
        ),
    )(pred_2d, gt_2d)

    total = jnp.sum(partials)      # only [0, 0] of each core's tile is nonzero
    if mean:
        return total / jnp.float32(n_elem)
    return total


def _reference(pred, gt, ratio=0.01, mean=True):
    d = pred.astype(jnp.float32) - gt.astype(jnp.float32)
    ad = jnp.abs(d)
    sl1 = jnp.where(ad < 1.0, 0.5 * d * d, ad - 0.5)
    w = jnp.where(gt != 0.0, 1.0, ratio)
    l = w * sl1
    return jnp.mean(l) if mean else jnp.sum(l)


if __name__ == "__main__":
    key = jax.random.PRNGKey(0)
    k_pred, k_gt, k_mask = jax.random.split(key, 3)

    # Small NCHW heatmap shapes, matching the module's typical usage.
    B, C, H, W = 2, 4, 16, 16
    pred = jax.random.normal(k_pred, (B, C, H, W), dtype=jnp.float32)
    gt_dense = jax.random.uniform(k_gt, (B, C, H, W), dtype=jnp.float32)
    # Sparse gt (many exact zeros) like a real heatmap target, so both
    # the positive and negative branches of the mask are exercised.
    keep = jax.random.uniform(k_mask, (B, C, H, W)) < 0.1
    gt = jnp.where(keep, gt_dense, 0.0)

    loss_mean = heatmap_loss_sl1(pred, gt, ratio=0.01, mean=True)
    loss_sum = heatmap_loss_sl1(pred, gt, ratio=0.01, mean=False)
    jax.block_until_ready(loss_mean)
    jax.block_until_ready(loss_sum)

    ref_mean = _reference(pred, gt, ratio=0.01, mean=True)
    ref_sum = _reference(pred, gt, ratio=0.01, mean=False)

    assert jnp.allclose(loss_mean, ref_mean, rtol=1e-5, atol=1e-6), (loss_mean, ref_mean)
    assert jnp.allclose(loss_sum, ref_sum, rtol=1e-5, atol=1e-5), (loss_sum, ref_sum)

    print("KERNEL_OK")
</pallas_src>

<mosaic_0001>
module attributes {stable_mosaic.version = 11 : i64} {
  func.func @_heatmap_sl1_kernel(%arg0: i32, %arg1: i32, %arg2: memref<16x128xf32, #tpu.memory_space<vmem>>, %arg3: memref<16x128xf32, #tpu.memory_space<vmem>>, %arg4: memref<8x128xf32, #tpu.memory_space<vmem>>, %arg5: memref<16x128xf32, #tpu.memory_space<vmem>>) attributes {dimension_semantics = [#tpu.dimension_semantics<parallel>, #tpu.dimension_semantics<arbitrary>], iteration_bounds = array<i64: 2, 1>, scalar_prefetch = 0 : i64, scratch_operands = 1 : i64, tpu.core_type = #tpu.core_type<tc>, window_params = [{transform_indices = @transform_0, window_bounds = array<i64: 16, 128>}, {transform_indices = @transform_1, window_bounds = array<i64: 16, 128>}, {transform_indices = @transform_2, window_bounds = array<i64: 8, 128>}]} {
    %c0_i32 = arith.constant 0 : i32
    %0 = arith.cmpi eq, %arg1, %c0_i32 : i32
    %1 = arith.extui %0 : i1 to i32
    %c0_i32_0 = arith.constant 0 : i32
    %2 = arith.cmpi ne, %1, %c0_i32_0 : i32
    scf.if %2 {
      %cst_15 = arith.constant 0.000000e+00 : f32
      %34 = vector.broadcast %cst_15 : f32 to vector<16x128xf32>
      %c0_16 = arith.constant 0 : index
      %c0_17 = arith.constant 0 : index
      %35 = vector.load %arg5[%c0_16, %c0_17] : memref<16x128xf32, #tpu.memory_space<vmem>>, vector<16x128xf32>
      tpu.vector_store %arg5[%c0_16, %c0_17], %34 {strides = array<i32>} : memref<16x128xf32, #tpu.memory_space<vmem>>, vector<16x128xf32>,
    } else {
    }
    %c0 = arith.constant 0 : index
    %c0_1 = arith.constant 0 : index
    %3 = vector.load %arg2[%c0, %c0_1] : memref<16x128xf32, #tpu.memory_space<vmem>>, vector<16x128xf32>
    %c0_2 = arith.constant 0 : index
    %c0_3 = arith.constant 0 : index
    %4 = vector.load %arg3[%c0_2, %c0_3] : memref<16x128xf32, #tpu.memory_space<vmem>>, vector<16x128xf32>
    %5 = arith.subf %3, %4 : vector<16x128xf32>
    %6 = math.absf %5 : vector<16x128xf32>
    %cst = arith.constant 1.000000e+00 : f32
    %7 = vector.broadcast %cst : f32 to vector<16x128xf32>
    %8 = arith.cmpf olt, %6, %7 : vector<16x128xf32>
    %cst_4 = arith.constant 5.000000e-01 : f32
    %9 = vector.broadcast %cst_4 : f32 to vector<16x128xf32>
    %10 = arith.mulf %9, %5 : vector<16x128xf32>
    %11 = arith.mulf %10, %5 : vector<16x128xf32>
    %cst_5 = arith.constant 5.000000e-01 : f32
    %12 = vector.broadcast %cst_5 : f32 to vector<16x128xf32>
    %13 = arith.subf %6, %12 : vector<16x128xf32>
    %14 = arith.select %8, %11, %13 : vector<16x128xi1>, vector<16x128xf32>
    %cst_6 = arith.constant 0.000000e+00 : f32
    %15 = vector.broadcast %cst_6 : f32 to vector<16x128xf32>
    %16 = arith.cmpf one, %4, %15 : vector<16x128xf32>
    %cst_7 = arith.constant 1.000000e+00 : f32
    %cst_8 = arith.constant 0.00999999977 : f32
    %17 = vector.broadcast %cst_7 : f32 to vector<16x128xf32>
    %18 = vector.broadcast %cst_8 : f32 to vector<16x128xf32>
    %19 = arith.select %16, %17, %18 : vector<16x128xi1>, vector<16x128xf32>
    %20 = arith.mulf %19, %14 : vector<16x128xf32>
    %c1_i32 = arith.constant 1 : i32
    %21 = arith.muli %arg0, %c1_i32 : i32
    %22 = arith.addi %21, %arg1 : i32
    %c16_i32 = arith.constant 16 : i32
    %23 = arith.muli %22, %c16_i32 : i32
    %c16_i32_9 = arith.constant 16 : i32
    %24 = arith.addi %23, %c16_i32_9 : i32
    %c16_i32_10 = arith.constant 16 : i32
    %25 = arith.cmpi sle, %24, %c16_i32_10 : i32
    %26 = arith.extui %25 : i1 to i32
    %c0_i32_11 = arith.constant 0 : i32
    %27 = arith.cmpi ne, %26, %c0_i32_11 : i32
    scf.if %27 {
      %c0_15 = arith.constant 0 : index
      %c0_16 = arith.constant 0 : index
      %34 = vector.load %arg5[%c0_15, %c0_16] : memref<16x128xf32, #tpu.memory_space<vmem>>, vector<16x128xf32>
      %35 = arith.addf %34, %20 : vector<16x128xf32>
      %c0_17 = arith.constant 0 : index
      %c0_18 = arith.constant 0 : index
      %36 = vector.load %arg5[%c0_17, %c0_18] : memref<16x128xf32, #tpu.memory_space<vmem>>, vector<16x128xf32>
      tpu.vector_store %arg5[%c0_17, %c0_18], %35 {strides = array<i32>} : memref<16x128xf32, #tpu.memory_space<vmem>>, vector<16x128xf32>,
    } else {
    }
    %true = arith.constant true
    %28 = arith.xori %25, %true : i1
    %29 = arith.extui %28 : i1 to i32
    %c0_i32_12 = arith.constant 0 : i32
    %30 = arith.cmpi ne, %29, %c0_i32_12 : i32
    scf.if %30 {
      %34 = tpu.iota {dimensions = array<i32: 0>} : vector<16x128xi32>
      %35 = vector.broadcast %23 : i32 to vector<16x128xi32>
      %36 = arith.addi %35, %34 : vector<16x128xi32>
      %c16_i32_15 = arith.constant 16 : i32
      %37 = vector.broadcast %c16_i32_15 : i32 to vector<16x128xi32>
      %38 = arith.cmpi slt, %36, %37 : vector<16x128xi32>
      %cst_16 = arith.constant 0.000000e+00 : f32
      %39 = vector.broadcast %cst_16 : f32 to vector<16x128xf32>
      %40 = arith.select %38, %20, %39 : vector<16x128xi1>, vector<16x128xf32>
      %c0_17 = arith.constant 0 : index
      %c0_18 = arith.constant 0 : index
      %41 = vector.load %arg5[%c0_17, %c0_18] : memref<16x128xf32, #tpu.memory_space<vmem>>, vector<16x128xf32>
      %42 = arith.addf %41, %40 : vector<16x128xf32>
      %c0_19 = arith.constant 0 : index
      %c0_20 = arith.constant 0 : index
      %43 = vector.load %arg5[%c0_19, %c0_20] : memref<16x128xf32, #tpu.memory_space<vmem>>, vector<16x128xf32>
      tpu.vector_store %arg5[%c0_19, %c0_20], %42 {strides = array<i32>} : memref<16x128xf32, #tpu.memory_space<vmem>>, vector<16x128xf32>,
    } else {
    }
    %c0_i32_13 = arith.constant 0 : i32
    %31 = arith.cmpi eq, %arg1, %c0_i32_13 : i32
    %32 = arith.extui %31 : i1 to i32
    %c0_i32_14 = arith.constant 0 : i32
    %33 = arith.cmpi ne, %32, %c0_i32_14 : i32
    scf.if %33 {
      %c0_15 = arith.constant 0 : index
      %c0_16 = arith.constant 0 : index
      %34 = vector.load %arg5[%c0_15, %c0_16] : memref<16x128xf32, #tpu.memory_space<vmem>>, vector<16x128xf32>
      %35 = vector.shape_cast %34 : vector<16x128xf32> to vector<1x16x128xf32>
      %cst_17 = arith.constant dense<0.000000e+00> : vector<1xf32>
      %36 = vector.multi_reduction <add>, %35, %cst_17 [1, 2] : vector<1x16x128xf32> to vector<1xf32>
      %37 = vector.shape_cast %36 : vector<1xf32> to vector<1x1x1xf32>
      %38 = vector.extract %37[0, 0, 0] : f32 from vector<1x1x1xf32>
      %39 = tpu.iota {dimensions = array<i32: 0>} : vector<8x128xi32>
      %40 = tpu.iota {dimensions = array<i32: 1>} : vector<8x128xi32>
      %c0_i32_18 = arith.constant 0 : i32
      %41 = vector.broadcast %c0_i32_18 : i32 to vector<8x128xi32>
      %42 = arith.cmpi eq, %39, %41 : vector<8x128xi32>
      %c0_i32_19 = arith.constant 0 : i32
      %43 = vector.broadcast %c0_i32_19 : i32 to vector<8x128xi32>
      %44 = arith.cmpi eq, %40, %43 : vector<8x128xi32>
      %45 = arith.andi %42, %44 : vector<8x128xi1>
      %cst_20 = arith.constant 0.000000e+00 : f32
      %46 = vector.broadcast %38 : f32 to vector<8x128xf32>
      %47 = vector.broadcast %cst_20 : f32 to vector<8x128xf32>
      %48 = arith.select %45, %46, %47 : vector<8x128xi1>, vector<8x128xf32>
      %c0_21 = arith.constant 0 : index
      %c0_22 = arith.constant 0 : index
      %49 = vector.load %arg4[%c0_21, %c0_22] : memref<8x128xf32, #tpu.memory_space<vmem>>, vector<8x128xf32>
      tpu.vector_store %arg4[%c0_21, %c0_22], %48 {strides = array<i32>} : memref<8x128xf32, #tpu.memory_space<vmem>>, vector<8x128xf32>,
    } else {
    }
    return
  }
  func.func @transform_0(%arg0: i32, %arg1: i32) -> (i32, i32) {
    %c1_i32 = arith.constant 1 : i32
    %0 = arith.muli %arg0, %c1_i32 : i32
    %1 = arith.addi %0, %arg1 : i32
    %c0_i32 = arith.constant 0 : i32
    %2 = arith.minsi %1, %c0_i32 : i32
    %c0_i32_0 = arith.constant 0 : i32
    %c0_i32_1 = arith.constant 0 : i32
    return %2, %c0_i32_0 : i32, i32
  }
  func.func @transform_1(%arg0: i32, %arg1: i32) -> (i32, i32) {
    %c1_i32 = arith.constant 1 : i32
    %0 = arith.muli %arg0, %c1_i32 : i32
    %1 = arith.addi %0, %arg1 : i32
    %c0_i32 = arith.constant 0 : i32
    %2 = arith.minsi %1, %c0_i32 : i32
    %c0_i32_0 = arith.constant 0 : i32
    %c0_i32_1 = arith.constant 0 : i32
    return %2, %c0_i32_0 : i32, i32
  }
  func.func @transform_2(%arg0: i32, %arg1: i32) -> (i32, i32) {
    %c0_i32 = arith.constant 0 : i32
    %c0_i32_0 = arith.constant 0 : i32
    return %arg0, %c0_i32 : i32, i32
  }
}

</mosaic_0001>

<llo_original>
// kernel: tpu_custom_call.1
$region0: #{tpu_custom_call.1}
  #allocation0 [shape = 'u32[]', space=smem, size = 0x4, offset = 0x4, fixed_abs, tag = 'smem constant byte address 0x4 - core index']
  #allocation1 [shape = 'u32[72,128]{1,0:T(1,128)}', space=vmem, size = 0x9000, scoped, tag = 'internal scratch']
  #allocation2 [shape = 'f32[16,128]{1,0:T(8,128)}', space=vmem, size = 0x2000, scoped, tag = 'scratch operand']
  %s0 = inlined_call_operand.hbm [shape: f32[16,128], index: 0, kind: input, shape index: {}]
  %s1 = inlined_call_operand.hbm [shape: f32[16,128], index: 1, kind: input, shape index: {}]
  %s2 = inlined_call_operand.hbm [shape: f32[16,128], index: 2, kind: output, shape index: {}]
  %s3 = sld [smem:[#allocation0]]
  $region65: #{tpu_custom_call.1} parent=0
    _
  %s5 = ssub.s32 1, %s3
  %s6 = scalar_select 0, %s5, %s3
  $region1: #{tpu_custom_call.1} parent=0
    #allocation3 [shape = 'u8[16384]{0}', space=vmem, size = 0x4000, scoped, tag = 'input window, operand 0']
    #allocation4 [shape = 's32[2]{0}', space=sflag, size = 0x8, scoped, tag = 'scoped memory for tpu_custom_call.1']
    #allocation5 [shape = 's32[2]{0}', space=sflag, size = 0x8, scoped, tag = 'scoped memory for tpu_custom_call.1']
    #allocation6 [shape = 'u8[16384]{0}', space=vmem, size = 0x4000, scoped, tag = 'input window, operand 1']
    #allocation7 [shape = 's32[2]{0}', space=sflag, size = 0x8, scoped, tag = 'scoped memory for tpu_custom_call.1']
    #allocation8 [shape = 'u8[8192]{0}', space=vmem, size = 0x2000, scoped, tag = 'output window, operand 0']
    %7 = vsyncpa [#allocation4], 0
    %s8 = scalar_lea.sflag [#allocation4], 1
    %9 = vsyncpa %s8, 0
    %10 = vsyncpa [#allocation7], 0
    %s11 = scalar_lea.sflag [#allocation7], 1
    %12 = vsyncpa %s11, 0
    %13 = vsyncpa [#allocation5], 0
    %s14 = scalar_lea.sflag [#allocation5], 1
    %15 = vsyncpa %s14, 0
    loop: start=0, step=1, limit=4
    $region2: #{tpu_custom_call.1} parent=1 // loop_pre_header
      _
    $region3: #{tpu_custom_call.1} parent=1 // loop_header
      %s17 = sphi 0, %s21
      %p18 = scmp.ge.s32.totalorder %s17, 4
      %s24 = sphi 0, %s36
      %s25 = sphi 0, %s32
      %s26 = sphi 0, %s24
      %s27 = sphi 0, %s25
      %s28 = sphi 0, %s26
      %s29 = sphi 0, %s27
      %s45 = sphi 0, %s47
      %s48 = sphi 0, %s45
      %s49 = sphi 0, %s48
      %s65 = sphi 0, %s49
      %s77 = sphi 0, %s79
      %s80 = sphi 0, %s77
      %s81 = sphi 0, %s80
      %s97 = sphi 0, %s81
      %s103 = sphi 0, %s105
      %s106 = sphi 0, %s103
      %s107 = sphi 0, %s106
      %s123 = sphi 0, %s107
    $region4: #{tpu_custom_call.1} parent=1 // loop_header_branch
      %20 = sbr.rel (%p18) target = $region8
    $region5: #{tpu_custom_call.1} parent=1 // loop_body
      %s22 = ssub.s32 %s17, 1
      %s23 = ssub.s32 %s17, 2
      %s30 = sadd.s32 1, %s25
      %p31 = scmp.ge.s32.totalorder %s30, 1
      %s32 = scalar_select %p31, 0, %s30
      %s33 = sadd.s32 1, %s24
      %s34 = scalar_select %p31, %s33, %s24
      %p35 = scmp.ge.s32.totalorder %s34, 2
      %s36 = scalar_select %p35, 0, %s34
      %s37 = sadd.s32 %s24, %s25
      %p38 = scmp.lt.s32.totalorder %s37, 0
      %s39 = scalar_select %p38, %s37, 0
      %s40 = sadd.s32 %s36, %s32
      %p41 = scmp.lt.s32.totalorder %s40, 0
      %s42 = scalar_select %p41, %s40, 0
      %s43 = ssub.s32 %s39, %s42
      %p44 = scmp.eq.s32.totalorder %s43, 0
      %s46 = sadd.s32 %s45, 1
      %s47 = scalar_select %p44, %s45, %s46
      %p50 = pneg %p44
      %p51 = scmp.eq.s32.totalorder %s17, 1
      %p52 = por %p50, %p51
      %p53 = scmp.ne.s32.totalorder %s45, %s48
      %p54 = scmp.eq.s32.totalorder %s17, 0
      %p55 = por %p53, %p54
      %p56 = scmp.ne.s32.totalorder %s45, %s48
      %p57 = scmp.eq.s32.totalorder %s22, 1
      %p58 = por %p56, %p57
      %p59 = scmp.ne.s32.totalorder %s48, %s49
      %p60 = scmp.eq.s32.totalorder %s22, 0
      %p61 = por %p59, %p60
      %p62 = scmp.ne.s32.totalorder %s48, %s49
      %p63 = scmp.eq.s32.totalorder %s23, 1
      %p64 = por %p62, %p63
      %p66 = scmp.ne.s32.totalorder %s49, %s65
      %p67 = scmp.eq.s32.totalorder %s23, 0
      %p68 = por %p66, %p67
      %s69 = sadd.s32 %s24, %s25
      %p70 = scmp.lt.s32.totalorder %s69, 0
      %s71 = scalar_select %p70, %s69, 0
      %s72 = sadd.s32 %s36, %s32
      %p73 = scmp.lt.s32.totalorder %s72, 0
      %s74 = scalar_select %p73, %s72, 0
      %s75 = ssub.s32 %s71, %s74
      %p76 = scmp.eq.s32.totalorder %s75, 0
      %s78 = sadd.s32 %s77, 1
      %s79 = scalar_select %p76, %s77, %s78
      %p82 = pneg %p76
      %p83 = scmp.eq.s32.totalorder %s17, 1
      %p84 = por %p82, %p83
      %p85 = scmp.ne.s32.totalorder %s77, %s80
      %p86 = scmp.eq.s32.totalorder %s17, 0
      %p87 = por %p85, %p86
      %p88 = scmp.ne.s32.totalorder %s77, %s80
      %p89 = scmp.eq.s32.totalorder %s22, 1
      %p90 = por %p88, %p89
      %p91 = scmp.ne.s32.totalorder %s80, %s81
      %p92 = scmp.eq.s32.totalorder %s22, 0
      %p93 = por %p91, %p92
      %p94 = scmp.ne.s32.totalorder %s80, %s81
      %p95 = scmp.eq.s32.totalorder %s23, 1
      %p96 = por %p94, %p95
      %p98 = scmp.ne.s32.totalorder %s81, %s97
      %p99 = scmp.eq.s32.totalorder %s23, 0
      %p100 = por %p98, %p99
      %s101 = ssub.s32 %s24, %s36
      %p102 = scmp.eq.s32.totalorder %s101, 0
      %s104 = sadd.s32 %s103, 1
      %s105 = scalar_select %p102, %s103, %s104
      %p108 = pneg %p102
      %p109 = scmp.eq.s32.totalorder %s17, 1
      %p110 = por %p108, %p109
      %p111 = scmp.ne.s32.totalorder %s103, %s106
      %p112 = scmp.eq.s32.totalorder %s17, 0
      %p113 = por %p111, %p112
      %p114 = scmp.ne.s32.totalorder %s103, %s106
      %p115 = scmp.eq.s32.totalorder %s22, 1
      %p116 = por %p114, %p115
      %p117 = scmp.ne.s32.totalorder %s106, %s107
      %p118 = scmp.eq.s32.totalorder %s22, 0
      %p119 = por %p117, %p118
      %p120 = scmp.ne.s32.totalorder %s106, %s107
      %p121 = scmp.eq.s32.totalorder %s23, 1
      %p122 = por %p120, %p121
      %p124 = scmp.ne.s32.totalorder %s107, %s123
      %p125 = scmp.eq.s32.totalorder %s23, 0
      %p126 = por %p124, %p125
      %p127 = scmp.le.s32.totalorder 1, %s17
      %p128 = scmp.lt.s32.totalorder %s17, 3
      %p129 = pnand %p127, %p128
      %p130 = pneg %p129
      // Predicated region
      $region9: #{tpu_custom_call.1} parent=5 // pred_check
        _
      $region10: #{tpu_custom_call.1} parent=5 // pred_check_branch
        %132 = sbr.rel (%p129) target = $region12
      $region11: #{tpu_custom_call.1} parent=5 // pred_region
        %s133 = ssub.s32 %s17, 1
      $region12: #{tpu_custom_call.1} parent=5 // pred_fallthru
        _
      %p134 = scmp.lt.s32.totalorder %s17, 2
      // Predicated region
      $region13: #{tpu_custom_call.1} parent=5 // pred_check
        %p135 = pneg %p134
      $region14: #{tpu_custom_call.1} parent=5 // pred_check_branch
        %137 = sbr.rel (%p135) target = $region16
      $region15: #{tpu_custom_call.1} parent=5 // pred_region
        // Predicated region
        $region17: #{tpu_custom_call.1} parent=15 // pred_check
          %p138 = pneg %p55
        $region18: #{tpu_custom_call.1} parent=15 // pred_check_branch
          %140 = sbr.rel (%p138) target = $region20
        $region19: #{tpu_custom_call.1} parent=15 // pred_region
          %s141 = sand.u32 %s45, 1
          %s142 = scalar_lea.sflag [#allocation4], %s141
          %s143 = sand.u32 %s45, 1
          %s144 = smul.addr %s143, 16
          %s145 = scalar_lea.vmem [#allocation3], %s144
          %s146 = sadd.s32 %s24, %s25
          %p147 = scmp.lt.s32.totalorder %s146, 0
          %s148 = scalar_select %p147, %s146, 0
          %s149 = smul.u32 2, %s148
          %151 = vsyncadd %s142, 0
          %s152 = smul.addr %s149, 8
          %s153 = scalar_lea.hbm %s0, %s152
          %s154 = sshll.u32 %s153, 4
          %s155 = int_to_ptr.hbm [resolvable:$true] %s154
          %s156 = sshll.u32 %s145, 4
          %s157 = int_to_ptr.vmem [resolvable:$true] %s156
          %162 = dma.hbm_to_vmem [thread:$0]  %s155, 256, %s157, %s142, 128, 128, 8
        $region20: #{tpu_custom_call.1} parent=15 // pred_fallthru
          _
        // Predicated region
        $region21: #{tpu_custom_call.1} parent=15 // pred_check
          %p163 = pneg %p87
        $region22: #{tpu_custom_call.1} parent=15 // pred_check_branch
          %165 = sbr.rel (%p163) target = $region24
        $region23: #{tpu_custom_call.1} parent=15 // pred_region
          %s166 = sand.u32 %s77, 1
          %s167 = scalar_lea.sflag [#allocation7], %s166
          %s168 = sand.u32 %s77, 1
          %s169 = smul.addr %s168, 16
          %s170 = scalar_lea.vmem [#allocation6], %s169
          %s171 = sadd.s32 %s24, %s25
          %p172 = scmp.lt.s32.totalorder %s171, 0
          %s173 = scalar_select %p172, %s171, 0
          %s174 = smul.u32 2, %s173
          %176 = vsyncadd %s167, 0
          %s177 = smul.addr %s174, 8
          %s178 = scalar_lea.hbm %s1, %s177
          %s179 = sshll.u32 %s178, 4
          %s180 = int_to_ptr.hbm [resolvable:$true] %s179
          %s181 = sshll.u32 %s170, 4
          %s182 = int_to_ptr.vmem [resolvable:$true] %s181
          %187 = dma.hbm_to_vmem [thread:$0]  %s180, 256, %s182, %s167, 128, 128, 8
        $region24: #{tpu_custom_call.1} parent=15 // pred_fallthru
          _
      $region16: #{tpu_custom_call.1} parent=5 // pred_fallthru
        _
      %p188 = scmp.le.s32.totalorder 1, %s17
      %p189 = scmp.lt.s32.totalorder %s17, 3
      %p190 = pnand %p188, %p189
      %p191 = pneg %p190
      // Predicated region
      $region25: #{tpu_custom_call.1} parent=5 // pred_check
        _
      $region26: #{tpu_custom_call.1} parent=5 // pred_check_branch
        %193 = sbr.rel (%p190) target = $region28
      $region27: #{tpu_custom_call.1} parent=5 // pred_region
        %s194 = ssub.s32 %s17, 1
        %s195 = sand.u32 %s48, 1
        %s196 = scalar_lea.sflag [#allocation4], %s195
        %s197 = sand.u32 %s48, 1
        %s198 = smul.addr %s197, 16
        %s199 = scalar_lea.vmem [#allocation3], %s198
        // Predicated region
        $region29: #{tpu_custom_call.1} parent=27 // pred_check
          %p200 = pneg %p61
        $region30: #{tpu_custom_call.1} parent=27 // pred_check_branch
          %202 = sbr.rel (%p200) target = $region32
        $region31: #{tpu_custom_call.1} parent=27 // pred_region
          %204 = dma.done %s196, 256
        $region32: #{tpu_custom_call.1} parent=27 // pred_fallthru
          _
        %s205 = sand.u32 %s80, 1
        %s206 = scalar_lea.sflag [#allocation7], %s205
        %s207 = sand.u32 %s80, 1
        %s208 = smul.addr %s207, 16
        %s209 = scalar_lea.vmem [#allocation6], %s208
        // Predicated region
        $region33: #{tpu_custom_call.1} parent=27 // pred_check
          %p210 = pneg %p93
        $region34: #{tpu_custom_call.1} parent=27 // pred_check_branch
          %212 = sbr.rel (%p210) target = $region36
        $region35: #{tpu_custom_call.1} parent=27 // pred_region
          %214 = dma.done %s206, 256
        $region36: #{tpu_custom_call.1} parent=27 // pred_fallthru
          _
        %s215 = sand.u32 %s48, 1
        %s216 = scalar_lea.sflag [#allocation4], %s215
        %s217 = sand.u32 %s48, 1
        %s218 = smul.addr %s217, 16
        %s219 = scalar_lea.vmem [#allocation3], %s218
        %p220 = pneg %p61
        %p221 = pneg %p58
        %s222 = sand.u32 %s80, 1
        %s223 = scalar_lea.sflag [#allocation7], %s222
        %s224 = sand.u32 %s80, 1
        %s225 = smul.addr %s224, 16
        %s226 = scalar_lea.vmem [#allocation6], %s225
        %p227 = pneg %p93
        %p228 = pneg %p90
        %p229 = pneg %p119
        %p230 = pneg %p116
        %s231 = sand.u32 %s106, 1
        %s232 = scalar_lea.sflag [#allocation5], %s231
        %s233 = sand.u32 %s106, 1
        %s234 = smul.addr %s233, 8
        %s235 = scalar_lea.vmem [#allocation8], %s234
        %s236 = sadd.s32 %s26, %s27
        %p237 = scmp.lt.s32.totalorder %s236, 0
        %s238 = scalar_select %p237, %s236, 0
        %s239 = smul.u32 2, %s238
        %s240 = sadd.s32 %s26, %s27
        %p241 = scmp.lt.s32.totalorder %s240, 0
        %s242 = scalar_select %p241, %s240, 0
        %s243 = smul.u32 2, %s242
        %p244 = scmp.eq.s32.totalorder %s27, 0
        // Predicated region
        $region37: #{tpu_custom_call.1} parent=27 // pred_check
          %p245 = pneg %p244
        $region38: #{tpu_custom_call.1} parent=27 // pred_check_branch
          %247 = sbr.rel (%p245) target = $region40
        $region39: #{tpu_custom_call.1} parent=27 // pred_region
          %248 = vst [vmem:[#allocation2] sm:$0xff] 0.0
          %249 = vst [vmem:[#allocation2 + $0x8] sm:$0xff] 0.0
        $region40: #{tpu_custom_call.1} parent=27 // pred_fallthru
          _
        %v250 = vld [vmem:[%s199] sm:$0xff]
        %v251 = vld [vmem:[%s199 + $0x8] sm:$0xff]
        %v252 = vld [vmem:[%s209] sm:$0xff]
        %v253 = vld [vmem:[%s209 + $0x8] sm:$0xff]
        %v254 = vsub.f32 %v250, %v252
        %v255 = vsub.f32 %v251, %v253
        %v256 = vand.u32 2147483647, %v254
        %v257 = vand.u32 2147483647, %v255
        %vm258 = vcmp.lt.f32.partialorder %v256, 1.0
        %vm259 = vcmp.lt.f32.partialorder %v257, 1.0
        %v260 = vmul.f32 %v254, 0.5
        %v261 = vmul.f32 %v255, 0.5
        %v262 = vmul.f32 %v260, %v254
        %v263 = vmul.f32 %v261, %v255
        %v264 = vsub.f32 %v256, 0.5
        %v265 = vsub.f32 %v257, 0.5
        %v266 = vsel %vm258, %v262, %v264
        %v267 = vsel %vm259, %v263, %v265
        %vm268 = vcmp.ne.f32.partialorder %v252, 0.0
        %vm269 = vcmp.ne.f32.partialorder %v253, 0.0
        %v270 = vsel %vm268, 1.0, 0.01
        %v271 = vsel %vm269, 1.0, 0.01
        %v272 = vmul.f32 %v270, %v266
        %v273 = vmul.f32 %v271, %v267
        %s274 = sadd.s32 %s26, %s27
        %s275 = smul.u32 %s274, 16
        %s276 = sadd.s32 %s275, 16
        %p277 = scmp.le.s32.totalorder %s276, 16
        // Predicated region
        $region41: #{tpu_custom_call.1} parent=27 // pred_check
          %p278 = pneg %p277
        $region42: #{tpu_custom_call.1} parent=27 // pred_check_branch
          %280 = sbr.rel (%p278) target = $region44
        $region43: #{tpu_custom_call.1} parent=27 // pred_region
          %v281 = vld [vmem:[#allocation2] sm:$0xff]
          %v282 = vld [vmem:[#allocation2 + $0x8] sm:$0xff]
          %v283 = vadd.f32 %v281, %v272
          %v284 = vadd.f32 %v282, %v273
          %285 = vst [vmem:[#allocation2] sm:$0xff] %v283
          %286 = vst [vmem:[#allocation2 + $0x8] sm:$0xff] %v284
        $region44: #{tpu_custom_call.1} parent=27 // pred_fallthru
          _
        %p287 = scmp.gt.s32.totalorder %s276, 16
        // Predicated region
        $region45: #{tpu_custom_call.1} parent=27 // pred_check
          %p288 = pneg %p287
        $region46: #{tpu_custom_call.1} parent=27 // pred_check_branch
          %290 = sbr.rel (%p288) target = $region48
        $region47: #{tpu_custom_call.1} parent=27 // pred_region
          %v291 = vlaneseq
          %v292 = vshrl.u32 %v291, 7
          %v293 = vadd.s32 %v292, 8
          %v294 = vstv %s275
          %v295 = vadd.s32 %v294, %v292
          %v296 = vadd.s32 %v294, %v293
          %vm297 = vcmp.lt.s32.totalorder %v295, 16
          %vm298 = vcmp.lt.s32.totalorder %v296, 16
          %v299 = vsel %vm297, %v272, 0.0
          %v300 = vsel %vm298, %v273, 0.0
          %v301 = vld [vmem:[#allocation2] sm:$0xff]
          %v302 = vld [vmem:[#allocation2 + $0x8] sm:$0xff]
          %v303 = vadd.f32 %v301, %v299
          %v304 = vadd.f32 %v302, %v300
          %305 = vst [vmem:[#allocation2] sm:$0xff] %v303
          %306 = vst [vmem:[#allocation2 + $0x8] sm:$0xff] %v304
        $region48: #{tpu_custom_call.1} parent=27 // pred_fallthru
          _
        // Predicated region
        $region49: #{tpu_custom_call.1} parent=27 // pred_check
          %p307 = pneg %p244
        $region50: #{tpu_custom_call.1} parent=27 // pred_check_branch
          %309 = sbr.rel (%p307) target = $region52
        $region51: #{tpu_custom_call.1} parent=27 // pred_region
          %v310 = vld [vmem:[#allocation2] sm:$0xff]
          %v311 = vld [vmem:[#allocation2 + $0x8] sm:$0xff]
          %v312 = vadd.f32 %v310, %v311
          %313 = vadd.xlane.f32.xlu0 %v312
          %v314 = vpop.xlane.xlu0 %313
          %v315 = vrot.slane %v314, 4
          %v316 = vadd.f32 %v314, %v315
          %v317 = vrot.slane %v316, 2
          %v318 = vadd.f32 %v316, %v317
          %v319 = vrot.slane %v318, 1
          %v320 = vadd.f32 %v318, %v319
          %s321 = vtos %v320
          %v322 = vlaneseq
          %v323 = vshrl.u32 %v322, 7
          %v324 = vlaneseq
          %v325 = vand.u32 %v324, 127
          %vm326 = vcmp.eq.s32.totalorder %v323, 0
          %vm327 = vcmp.eq.s32.totalorder %v325, 0
          %vm328 = vmand %vm326, %vm327
          %v329 = vstv %s321
          %v330 = vsel %vm328, %v329, 0.0
          %331 = vst [vmem:[%s235] sm:$0xff] %v330
        $region52: #{tpu_custom_call.1} parent=27 // pred_fallthru
          _
        %s332 = sand.u32 %s106, 1
        %s333 = scalar_lea.sflag [#allocation5], %s332
        %s334 = sand.u32 %s106, 1
        %s335 = smul.addr %s334, 8
        %s336 = scalar_lea.vmem [#allocation8], %s335
        // Predicated region
        $region53: #{tpu_custom_call.1} parent=27 // pred_check
          %p337 = pneg %p116
        $region54: #{tpu_custom_call.1} parent=27 // pred_check_branch
          %339 = sbr.rel (%p337) target = $region56
        $region55: #{tpu_custom_call.1} parent=27 // pred_region
          %341 = vsyncadd %s333, 0
          %s342 = smul.addr %s26, 8
          %s343 = scalar_lea.hbm %s2, %s342
          %s345 = sshll.u32 %s336, 4
          %s346 = int_to_ptr.vmem [resolvable:$true] %s345
          %s347 = sshll.u32 %s343, 4
          %s348 = int_to_ptr.hbm [resolvable:$true] %s347
          %350 = dma.vmem_to_hbm [thread:$0]  %s346, 128, %s348, %s333
        $region56: #{tpu_custom_call.1} parent=27 // pred_fallthru
          _
      $region28: #{tpu_custom_call.1} parent=5 // pred_fallthru
        _
      %p351 = scmp.le.s32.totalorder 2, %s17
      // Predicated region
      $region57: #{tpu_custom_call.1} parent=5 // pred_check
        %p352 = pneg %p351
      $region58: #{tpu_custom_call.1} parent=5 // pred_check_branch
        %354 = sbr.rel (%p352) target = $region60
      $region59: #{tpu_custom_call.1} parent=5 // pred_region
        %s355 = ssub.s32 %s17, 2
        // Predicated region
        $region61: #{tpu_custom_call.1} parent=59 // pred_check
          %p356 = pneg %p122
        $region62: #{tpu_custom_call.1} parent=59 // pred_check_branch
          %358 = sbr.rel (%p356) target = $region64
        $region63: #{tpu_custom_call.1} parent=59 // pred_region
          %s359 = sand.u32 %s107, 1
          %s360 = scalar_lea.sflag [#allocation5], %s359
          %s361 = sand.u32 %s107, 1
          %s362 = smul.addr %s361, 8
          %s363 = scalar_lea.vmem [#allocation8], %s362
          %365 = dma.done %s360, 128
        $region64: #{tpu_custom_call.1} parent=59 // pred_fallthru
          _
      $region60: #{tpu_custom_call.1} parent=5 // pred_fallthru
        _
    $region6: #{tpu_custom_call.1} parent=1 // loop_footer
      %s21 = sadd.s32 1, %s17
    $region7: #{tpu_custom_call.1} parent=1 // loop_footer_branch
      %16 = sbr.rel target = $region3
    $region8: #{tpu_custom_call.1} parent=1 // loop_exit
      _
    %366 = vsyncpa [#allocation4], 1
    %s367 = scalar_lea.sflag [#allocation4], 1
    %368 = vsyncpa %s367, 1
    %369 = vsyncpa [#allocation7], 1
    %s370 = scalar_lea.sflag [#allocation7], 1
    %371 = vsyncpa %s370, 1
    %372 = vsyncpa [#allocation5], 1
    %s373 = scalar_lea.sflag [#allocation5], 1
    %374 = vsyncpa %s373, 1

</llo_original>
